<compile_context>
chip_gen: v7x
topology: tpu7x:2x2x1
jax: 0.10.0
libtpu: 0.0.40
codegen_flags: <defaults>
</compile_context>

<pallas_src>
import jax
import jax.numpy as jnp
from jax import lax
from jax.experimental import pallas as pl
from jax.experimental.pallas import tpu as pltpu


_VP = 128  # padded table width in lanes; requires (2*size-1)**2 < 128


def _rel_pos_bias_gather_kernel(idx_ref, table_ref, out_ref):
    # idx_ref:   (8, M_pad)     int32  flat lookup indices, replicated on sublanes
    # table_ref: (H_pad, 128)   f32    transposed, zero-padded embedding table
    # out_ref:   (H_pad, M_pad) out dtype (cast on store)
    h_pad = table_ref.shape[0]
    m_pad = idx_ref.shape[1]
    for h0 in range(0, h_pad, 8):                 # one vreg (8 sublanes) of heads
        tab_h = table_ref[pl.ds(h0, 8), :]        # (8, 128): single table vreg live
        for c in range(m_pad // 128):             # static, fully unrolled chunks
            csl = pl.ds(c * 128, 128)
            # promise_in_bounds is safe: indices are either valid table entries
            # (< v < 128, guaranteed by make_pos_indices) or the sentinel zero
            # lane v; user-supplied indices must satisfy 0 <= idx < v.
            out_ref[pl.ds(h0, 8), csl] = jnp.take_along_axis(
                tab_h, idx_ref[:, csl], axis=1, mode="promise_in_bounds"
            ).astype(out_ref.dtype)


def _rel_pos_bias_onehot_kernel(idx_ref, table_ref, out_ref):
    # Explicitly-selected fallback (use_gather=False) for toolchains without the
    # in-vreg gather lowering.  Same tiling/layout; lookup via a small one-hot
    # matmul per 128-lane chunk.  The loop-invariant iota is hoisted (JAX does
    # not CSE broadcast_in_dim/iota inside unrolled loops).
    v_pad = table_ref.shape[1]
    m_pad = idx_ref.shape[1]
    tab = table_ref[...]
    iota = lax.broadcasted_iota(jnp.int32, (v_pad, 128), 0)          # hoisted
    for c in range(m_pad // 128):
        csl = pl.ds(c * 128, 128)
        onehot = (iota == idx_ref[pl.ds(0, 1), csl]).astype(tab.dtype)  # (v_pad, 128)
        out_ref[:, csl] = lax.dot_general(
            tab, onehot, (((1,), (0,)), ((), ())),
            preferred_element_type=jnp.float32).astype(out_ref.dtype)


def _round_up(x, m):
    return (x + m - 1) // m * m


def make_pos_indices(size):
    """Reproduces the buffer built in RelPosBias2d.__init__."""
    ar = jnp.arange(size)
    hh, ww = jnp.meshgrid(ar, ar, indexing="ij")
    pos = jnp.stack([hh, ww], axis=-1).reshape(-1, 2)          # (size*size, 2)
    rel = pos[:, None, :] - pos[None, :, :] + (size - 1)       # (N, N, 2)
    return (rel[..., 0] * (2 * size - 1) + rel[..., 1]).astype(jnp.int32)


def prepare_rel_pos_bias(pos_indices, pos_bias_table, i, j):
    """Shape-static, qk-independent prep.  Compute once per (size, heads, i, j)
    and reuse; this is intentionally NOT part of the per-forward hot path."""
    v, heads = pos_bias_table.shape
    n = pos_indices.shape[0]
    if i > n or (j - 1) > n:
        raise ValueError(f"qk window ({i},{j}) exceeds pos_indices buffer ({n},{n})")
    if j < 1:
        raise ValueError("qk must have at least the null-key column")
    if v >= _VP:
        raise NotImplementedError("embedding tables with >= 128 entries need chunked gather")

    h_pad = _round_up(max(heads, 1), 8)

    # Transposed, zero-padded table: heads on sublanes, entries on lanes.
    # Lanes [v, 128) are 0.0 and serve as the sentinel lookup for the null-key
    # zero column and for lane-padding positions.
    table_pad = (jnp.zeros((h_pad, _VP), jnp.float32)
                 .at[:heads, :v].set(pos_bias_table.T.astype(jnp.float32)))
    sentinel = jnp.int32(v)

    # Flat lookup index for every element of the (i, j) bias; column 0 is the
    # sentinel, so F.pad's zero column comes out of the gather for free.
    idx = pos_indices[:i, :j - 1].astype(jnp.int32)
    idx_full = jnp.concatenate(
        [jnp.full((i, 1), sentinel, jnp.int32), idx], axis=1)     # (i, j)
    m = i * j
    m_pad = _round_up(m, 128)                                     # minimal lane padding
    idx_flat = (jnp.full((1, m_pad), sentinel, jnp.int32)
                .at[0, :m].set(idx_full.reshape(-1)))
    # Replicate across 8 sublanes once here, so the kernel's per-chunk (8, 128)
    # index tile is a plain vector load (no in-kernel broadcast per chunk).
    idx_rep = jnp.broadcast_to(idx_flat, (8, m_pad))
    return idx_rep, table_pad, (heads, h_pad, i, j, m, m_pad)


def rel_pos_bias_2d_prepared(idx_rep, table_pad, meta, *,
                             out_dtype=jnp.float32, use_gather=True):
    """Run the Pallas kernel on prepared inputs.  Returns bias (heads, i, j)."""
    heads, h_pad, i, j, m, m_pad = meta
    kernel = _rel_pos_bias_gather_kernel if use_gather else _rel_pos_bias_onehot_kernel

    out2d = pl.pallas_call(
        kernel,
        out_shape=jax.ShapeDtypeStruct((h_pad, m_pad), out_dtype),
        grid_spec=pltpu.PrefetchScalarGridSpec(
            num_scalar_prefetch=0,
            grid=(1,),  # whole problem resident in VMEM in a single step
            in_specs=[
                pl.BlockSpec((8, m_pad), lambda t: (0, 0)),      # replicated indices
                pl.BlockSpec((h_pad, _VP), lambda t: (0, 0)),    # table (resident)
            ],
            out_specs=pl.BlockSpec((h_pad, m_pad), lambda t: (0, 0)),
        ),
        compiler_params=pltpu.CompilerParams(
            # one step: megacore sharding is moot; default VMEM budget is ample
            dimension_semantics=("arbitrary",),
        ),
    )(idx_rep, table_pad)

    # Wrapper-side layout plumbing only: drop head/lane padding, restore (h, i, j).
    return out2d[:heads, :m].reshape(heads, i, j)


def rel_pos_bias_2d(qk, pos_indices, pos_bias_table, *,
                    out_dtype=jnp.float32, use_gather=True):
    """Forward pass of RelPosBias2d. Returns bias of shape (heads, i, j).

    If the consumer adds the bias to bf16 qk, pass out_dtype=jnp.bfloat16 to
    halve writeback bytes (cast happens on the final store inside the kernel).
    """
    i, j = int(qk.shape[-2]), int(qk.shape[-1])
    idx_rep, table_pad, meta = prepare_rel_pos_bias(pos_indices, pos_bias_table, i, j)
    return rel_pos_bias_2d_prepared(idx_rep, table_pad, meta,
                                    out_dtype=out_dtype, use_gather=use_gather)


if __name__ == "__main__":
    size, heads, batch = 4, 4, 2
    N = size * size                      # i = 16
    V = (2 * size - 1) ** 2              # 49

    key = jax.random.PRNGKey(0)
    k_tab, k_qk = jax.random.split(key)

    # nn.Embedding((2*size-1)**2, heads).weight, deterministic init
    pos_bias_table = jax.random.normal(k_tab, (V, heads), dtype=jnp.float32)
    pos_indices = make_pos_indices(size)

    # qk: attention logits with one extra "null key" column -> (2, 4, 16, 17)
    qk = jax.random.normal(k_qk, (batch, heads, N, N + 1), dtype=jnp.float32)

    bias = rel_pos_bias_2d(qk, pos_indices, pos_bias_table)
    bias = jax.block_until_ready(bias)

    # pure-JAX reference of the PyTorch forward
    i, j = qk.shape[-2], qk.shape[-1]
    ref = pos_bias_table[pos_indices[:i, :j - 1]]      # (i, j-1, heads)
    ref = jnp.transpose(ref, (2, 0, 1))                # (heads, i, j-1)
    ref = jnp.pad(ref, ((0, 0), (0, 0), (1, 0)))       # (heads, i, j)

    assert bias.shape == (heads, i, j)
    assert bias.dtype == jnp.float32
    assert jnp.allclose(bias, ref, atol=1e-6, rtol=1e-6)
    print("KERNEL_OK")
</pallas_src>

<mosaic_0001>
module attributes {stable_mosaic.version = 11 : i64} {
  func.func @_rel_pos_bias_gather_kernel(%arg0: i32, %arg1: memref<8x384xi32, #tpu.memory_space<vmem>>, %arg2: memref<8x128xf32, #tpu.memory_space<vmem>>, %arg3: memref<8x384xf32, #tpu.memory_space<vmem>>) attributes {dimension_semantics = [#tpu.dimension_semantics<arbitrary>], iteration_bounds = array<i64: 1>, scalar_prefetch = 0 : i64, scratch_operands = 0 : i64, tpu.core_type = #tpu.core_type<tc>, window_params = [{pipeline_mode = #tpu.pipeline_mode<synchronous>, transform_indices = @transform_0, window_bounds = array<i64: 8, 384>}, {pipeline_mode = #tpu.pipeline_mode<synchronous>, transform_indices = @transform_1, window_bounds = array<i64: 8, 128>}, {pipeline_mode = #tpu.pipeline_mode<synchronous>, transform_indices = @transform_2, window_bounds = array<i64: 8, 384>}]} {
    %c0 = arith.constant 0 : index
    %c0_0 = arith.constant 0 : index
    %0 = vector.load %arg2[%c0, %c0_0] : memref<8x128xf32, #tpu.memory_space<vmem>>, vector<8x128xf32>
    %c0_1 = arith.constant 0 : index
    %c0_2 = arith.constant 0 : index
    %1 = vector.load %arg1[%c0_1, %c0_2] : memref<8x384xi32, #tpu.memory_space<vmem>>, vector<8x128xi32>
    %2 = vector.shape_cast %1 : vector<8x128xi32> to vector<8x128x1xi32>
    %3 = vector.shape_cast %2 : vector<8x128x1xi32> to vector<8x128xi32>
    %4 = tpu.dynamic_gather %0[%3] in [1] : vector<8x128xf32>, vector<8x128xi32> -> vector<8x128xf32>
    %c0_3 = arith.constant 0 : index
    %c0_4 = arith.constant 0 : index
    %5 = vector.load %arg3[%c0_3, %c0_4] : memref<8x384xf32, #tpu.memory_space<vmem>>, vector<8x128xf32>
    tpu.vector_store %arg3[%c0_3, %c0_4], %4 {strides = array<i32>} : memref<8x384xf32, #tpu.memory_space<vmem>>, vector<8x128xf32>,
    %c0_5 = arith.constant 0 : index
    %c128 = arith.constant 128 : index
    %6 = vector.load %arg1[%c0_5, %c128] : memref<8x384xi32, #tpu.memory_space<vmem>>, vector<8x128xi32>
    %7 = vector.shape_cast %6 : vector<8x128xi32> to vector<8x128x1xi32>
    %8 = vector.shape_cast %7 : vector<8x128x1xi32> to vector<8x128xi32>
    %9 = tpu.dynamic_gather %0[%8] in [1] : vector<8x128xf32>, vector<8x128xi32> -> vector<8x128xf32>
    %c0_6 = arith.constant 0 : index
    %c128_7 = arith.constant 128 : index
    %10 = vector.load %arg3[%c0_6, %c128_7] : memref<8x384xf32, #tpu.memory_space<vmem>>, vector<8x128xf32>
    tpu.vector_store %arg3[%c0_6, %c128_7], %9 {strides = array<i32>} : memref<8x384xf32, #tpu.memory_space<vmem>>, vector<8x128xf32>,
    %c0_8 = arith.constant 0 : index
    %c256 = arith.constant 256 : index
    %11 = vector.load %arg1[%c0_8, %c256] : memref<8x384xi32, #tpu.memory_space<vmem>>, vector<8x128xi32>
    %12 = vector.shape_cast %11 : vector<8x128xi32> to vector<8x128x1xi32>
    %13 = vector.shape_cast %12 : vector<8x128x1xi32> to vector<8x128xi32>
    %14 = tpu.dynamic_gather %0[%13] in [1] : vector<8x128xf32>, vector<8x128xi32> -> vector<8x128xf32>
    %c0_9 = arith.constant 0 : index
    %c256_10 = arith.constant 256 : index
    %15 = vector.load %arg3[%c0_9, %c256_10] : memref<8x384xf32, #tpu.memory_space<vmem>>, vector<8x128xf32>
    tpu.vector_store %arg3[%c0_9, %c256_10], %14 {strides = array<i32>} : memref<8x384xf32, #tpu.memory_space<vmem>>, vector<8x128xf32>,
    return
  }
  func.func @transform_0(%arg0: i32) -> (i32, i32) {
    %c0_i32 = arith.constant 0 : i32
    %c0_i32_0 = arith.constant 0 : i32
    %c0_i32_1 = arith.constant 0 : i32
    return %c0_i32, %c0_i32_0 : i32, i32
  }
  func.func @transform_1(%arg0: i32) -> (i32, i32) {
    %c0_i32 = arith.constant 0 : i32
    %c0_i32_0 = arith.constant 0 : i32
    %c0_i32_1 = arith.constant 0 : i32
    return %c0_i32, %c0_i32_0 : i32, i32
  }
  func.func @transform_2(%arg0: i32) -> (i32, i32) {
    %c0_i32 = arith.constant 0 : i32
    %c0_i32_0 = arith.constant 0 : i32
    %c0_i32_1 = arith.constant 0 : i32
    return %c0_i32, %c0_i32_0 : i32, i32
  }
}

</mosaic_0001>

<llo_original>
// kernel: tpu_custom_call.1
$region0: #{tpu_custom_call.1}
  #allocation0 [shape = 'u32[]', space=smem, size = 0x4, offset = 0x4, fixed_abs, tag = 'smem constant byte address 0x4 - core index']
  #allocation1 [shape = 'u32[144,128]{1,0:T(1,128)}', space=vmem, size = 0x12000, scoped, tag = 'internal scratch']
  %s0 = inlined_call_operand.hbm [shape: s32[8,384], index: 0, kind: input, shape index: {}]
  %s1 = inlined_call_operand.hbm [shape: f32[8,128], index: 1, kind: input, shape index: {}]
  %s2 = inlined_call_operand.hbm [shape: f32[8,384], index: 2, kind: output, shape index: {}]
  %s3 = sld [smem:[#allocation0]]
  $region26: #{tpu_custom_call.1} parent=0
    _
  %s5 = ssub.s32 1, %s3
  %s6 = scalar_select 0, %s5, %s3
  $region1: #{tpu_custom_call.1} parent=0
    #allocation2 [shape = 'u8[12288]{0}', space=vmem, size = 0x3000, scoped, tag = 'input window, operand 0, single buffered']
    #allocation3 [shape = 's32[1]{0}', space=sflag, size = 0x4, scoped, tag = 'scoped memory for tpu_custom_call.1']
    #allocation4 [shape = 's32[1]{0}', space=sflag, size = 0x4, scoped, tag = 'scoped memory for tpu_custom_call.1']
    #allocation5 [shape = 'u8[4096]{0}', space=vmem, size = 0x1000, scoped, tag = 'input window, operand 1, single buffered']
    #allocation6 [shape = 's32[1]{0}', space=sflag, size = 0x4, scoped, tag = 'scoped memory for tpu_custom_call.1']
    #allocation7 [shape = 'u8[12288]{0}', space=vmem, size = 0x3000, scoped, tag = 'output window, operand 0, single buffered']
    %7 = vsyncpa [#allocation3], 0
    %8 = vsyncpa [#allocation6], 0
    %9 = vsyncpa [#allocation4], 0
    // Predicated region
    $region2: #{tpu_custom_call.1} parent=1 // pred_check
      _
    $region3: #{tpu_custom_call.1} parent=1 // pred_check_branch
      %11 = sbr.rel (0) target = $region5
    $region4: #{tpu_custom_call.1} parent=1 // pred_region
      %s13 = ssub.s32 384, 384
      %14 = vsyncadd [#allocation3], %s13
      %s16 = sshll.u32 [#allocation2], 4
      %s17 = int_to_ptr.vmem [resolvable:$true] %s16
      %19 = dma.hbm_to_vmem [thread:$0]  %s0, 384, %s17, [#allocation3]
    $region5: #{tpu_custom_call.1} parent=1 // pred_fallthru
      _
    // Predicated region
    $region6: #{tpu_custom_call.1} parent=1 // pred_check
      _
    $region7: #{tpu_custom_call.1} parent=1 // pred_check_branch
      %21 = sbr.rel (0) target = $region9
    $region8: #{tpu_custom_call.1} parent=1 // pred_region
      %s23 = ssub.s32 128, 128
      %24 = vsyncadd [#allocation6], %s23
      %s26 = sshll.u32 [#allocation5], 4
      %s27 = int_to_ptr.vmem [resolvable:$true] %s26
      %29 = dma.hbm_to_vmem [thread:$0]  %s1, 128, %s27, [#allocation6]
    $region9: #{tpu_custom_call.1} parent=1 // pred_fallthru
      _
    // Predicated region
    $region10: #{tpu_custom_call.1} parent=1 // pred_check
      _
    $region11: #{tpu_custom_call.1} parent=1 // pred_check_branch
      %31 = sbr.rel (0) target = $region13
    $region12: #{tpu_custom_call.1} parent=1 // pred_region
      %32 = dma.done [#allocation3], 384
    $region13: #{tpu_custom_call.1} parent=1 // pred_fallthru
      _
    // Predicated region
    $region14: #{tpu_custom_call.1} parent=1 // pred_check
      _
    $region15: #{tpu_custom_call.1} parent=1 // pred_check_branch
      %34 = sbr.rel (0) target = $region17
    $region16: #{tpu_custom_call.1} parent=1 // pred_region
      %35 = dma.done [#allocation6], 128
    $region17: #{tpu_custom_call.1} parent=1 // pred_fallthru
      _
    %v36 = vld [vmem:[#allocation5] sm:$0xff]
    %v37 = vld [vmem:[#allocation2] sm:$0xff]
    %38 = vset.pattern.permute.xlu0 %v37
    %39 = vperm.xlu0 %38, %v36
    %v40 = vpop.permute.xlu0 %39
    %41 = vst [vmem:[#allocation7] sm:$0xff] %v40
    %v42 = vld [vmem:[#allocation2 + $0x8] sm:$0xff]
    %43 = vset.pattern.permute.xlu0 %v42
    %44 = vperm.xlu0 %43, %v36
    %v45 = vpop.permute.xlu0 %44
    %46 = vst [vmem:[#allocation7 + $0x8] sm:$0xff] %v45
    %v47 = vld [vmem:[#allocation2 + $0x10] sm:$0xff]
    %48 = vset.pattern.permute.xlu0 %v47
    %49 = vperm.xlu0 %48, %v36
    %v50 = vpop.permute.xlu0 %49
    %51 = vst [vmem:[#allocation7 + $0x10] sm:$0xff] %v50
    // Predicated region
    $region18: #{tpu_custom_call.1} parent=1 // pred_check
      _
    $region19: #{tpu_custom_call.1} parent=1 // pred_check_branch
      %53 = sbr.rel (0) target = $region21
    $region20: #{tpu_custom_call.1} parent=1 // pred_region
      %s55 = ssub.s32 384, 384
      %56 = vsyncadd [#allocation4], %s55
      %s58 = sshll.u32 [#allocation7], 4
      %s59 = int_to_ptr.vmem [resolvable:$true] %s58
      %61 = dma.vmem_to_hbm [thread:$0]  %s59, 384, %s2, [#allocation4]
    $region21: #{tpu_custom_call.1} parent=1 // pred_fallthru
      _
    // Predicated region
    $region22: #{tpu_custom_call.1} parent=1 // pred_check
      _
    $region23: #{tpu_custom_call.1} parent=1 // pred_check_branch
      %63 = sbr.rel (0) target = $region25
    $region24: #{tpu_custom_call.1} parent=1 // pred_region
      %64 = dma.done [#allocation4], 384
    $region25: #{tpu_custom_call.1} parent=1 // pred_fallthru
      _
    %65 = vsyncpa [#allocation3], 1
    %66 = vsyncpa [#allocation6], 1
    %67 = vsyncpa [#allocation4], 1

</llo_original>
